<compile_context>
chip_gen: v7x
topology: tpu7x:2x2x1
jax: 0.10.0
libtpu: 0.0.40
codegen_flags: <defaults>
</compile_context>

<pallas_src>
import jax
import jax.numpy as jnp
from jax.experimental import pallas as pl
from jax.experimental.pallas import tpu as pltpu

_LANES = 128
_SUBLANES = 8
_TILE_ELEMS = _LANES * _SUBLANES  # 1024


def _identity_kernel(x_ref, o_ref):
    # Pure pass-through: the reference forward has no compute.
    o_ref[...] = x_ref[...]


def _run_passthrough(src, trg):
    """Demo-only: one grid-free, lane-dense, tile-aligned Pallas copy."""
    assert src.dtype == trg.dtype, "demo uses a single stacked buffer"
    src_shape, trg_shape = src.shape, trg.shape
    n_src = src.size
    n_trg = trg.size

    # Stack both tensors into a single flat buffer (one in_ref / out_ref pair).
    flat = jnp.concatenate([src.reshape(-1), trg.reshape(-1)])
    total = flat.shape[0]

    # Pad to a multiple of 8*128 elements so the block is a full (8,128)-tiled
    # slab: unmasked full-lane vst, dense DMA tiles, works for any (B, S, H).
    pad = (-total) % _TILE_ELEMS
    if pad:
        flat = jnp.pad(flat, (0, pad))
    rows = flat.shape[0] // _LANES  # multiple of 8 by construction
    flat2 = flat.reshape(rows, _LANES)

    vmem_spec = pl.BlockSpec(memory_space=pltpu.MemorySpace.VMEM)

    out2 = pl.pallas_call(
        _identity_kernel,
        # No grid: single invocation, whole (tiny) array resident in VMEM.
        in_specs=[vmem_spec],
        out_specs=vmem_spec,
        out_shape=jax.ShapeDtypeStruct((rows, _LANES), flat2.dtype),
        # Donate the input buffer: pure copy needs no fresh output allocation.
        input_output_aliases={0: 0},
    )(flat2)

    out_flat = out2.reshape(-1)
    src_out = out_flat[:n_src].reshape(src_shape)
    trg_out = out_flat[n_src:n_src + n_trg].reshape(trg_shape)
    return src_out, trg_out


def bert_discriminator_forward(src, trg):
    """Exact semantics of BERT_Discriminator.forward: no compute, returns None."""
    # TODO(synk): reference forward body is empty (`return`); no compute to port,
    # so no Pallas kernel is launched on the forward path (dead work removed).
    return None


if __name__ == "__main__":
    key = jax.random.PRNGKey(0)
    k_src, k_trg = jax.random.split(key)

    batch, seq, hidden = 2, 8, 32
    src = jax.random.normal(k_src, (batch, seq, hidden), dtype=jnp.float32)
    trg = jax.random.normal(k_trg, (batch, seq, hidden), dtype=jnp.float32)

    # Demo: run the minimal Pallas kernel once and block on its result.
    src_out, trg_out = _run_passthrough(src, trg)
    jax.block_until_ready(src_out)
    jax.block_until_ready(trg_out)
    assert jnp.allclose(src_out, src) and jnp.allclose(trg_out, trg)

    # Match the PyTorch module's forward semantics exactly (no kernel launched).
    result = bert_discriminator_forward(src, trg)
    assert result is None

    print("KERNEL_OK")
</pallas_src>

<mosaic_0001>
module attributes {stable_mosaic.version = 11 : i64} {
  func.func @_identity_kernel(%arg0: memref<8x128xf32, #tpu.memory_space<vmem>>, %arg1: memref<8x128xf32, #tpu.memory_space<vmem>>) attributes {dimension_semantics = [], scalar_prefetch = 0 : i64, scratch_operands = 0 : i64, tpu.core_type = #tpu.core_type<tc>} {
    %c0 = arith.constant 0 : index
    %c0_0 = arith.constant 0 : index
    %0 = vector.load %arg0[%c0, %c0_0] : memref<8x128xf32, #tpu.memory_space<vmem>>, vector<8x128xf32>
    %c0_1 = arith.constant 0 : index
    %c0_2 = arith.constant 0 : index
    %1 = vector.load %arg1[%c0_1, %c0_2] : memref<8x128xf32, #tpu.memory_space<vmem>>, vector<8x128xf32>
    tpu.vector_store %arg1[%c0_1, %c0_2], %0 {strides = array<i32>} : memref<8x128xf32, #tpu.memory_space<vmem>>, vector<8x128xf32>,
    return
  }
}

</mosaic_0001>

<llo_original>
// kernel: tpu_custom_call.1
$region0: #{tpu_custom_call.1}
  #allocation0 [shape = 'u32[]', space=smem, size = 0x4, offset = 0x4, fixed_abs, tag = 'smem constant byte address 0x4 - core index']
  #allocation1 [shape = 'u32[144,128]{1,0:T(1,128)}', space=vmem, size = 0x12000, scoped, tag = 'internal scratch']
  %s0 = inlined_call_operand.hbm [shape: f32[8,128], index: 0, kind: input, shape index: {}, may-alias: {0,1}]
  %s1 = inlined_call_operand.hbm [shape: f32[8,128], index: 1, kind: output, shape index: {}, may-alias: {0,1}]
  %s2 = sld [smem:[#allocation0]]
  $region18: #{tpu_custom_call.1} parent=0
    _
  %s4 = ssub.s32 1, %s2
  %s5 = scalar_select 0, %s4, %s2
  $region1: #{tpu_custom_call.1} parent=0
    #allocation2 [shape = 'u8[4096]{0}', space=vmem, size = 0x1000, scoped, tag = 'input window, operand 0, single buffered']
    #allocation3 [shape = 's32[1]{0}', space=sflag, size = 0x4, scoped, tag = 'scoped memory for tpu_custom_call.1']
    #allocation4 [shape = 's32[1]{0}', space=sflag, size = 0x4, scoped, tag = 'scoped memory for tpu_custom_call.1']
    #allocation5 [shape = 'u8[4096]{0}', space=vmem, size = 0x1000, scoped, tag = 'output window, operand 0, single buffered']
    %6 = vsyncpa [#allocation3], 0
    %7 = vsyncpa [#allocation4], 0
    // Predicated region
    $region2: #{tpu_custom_call.1} parent=1 // pred_check
      _
    $region3: #{tpu_custom_call.1} parent=1 // pred_check_branch
      %9 = sbr.rel (0) target = $region5
    $region4: #{tpu_custom_call.1} parent=1 // pred_region
      %s11 = ssub.s32 128, 128
      %12 = vsyncadd [#allocation3], %s11
      %s14 = sshll.u32 [#allocation2], 4
      %s15 = int_to_ptr.vmem [resolvable:$true] %s14
      %17 = dma.hbm_to_vmem [thread:$0]  %s0, 128, %s15, [#allocation3]
    $region5: #{tpu_custom_call.1} parent=1 // pred_fallthru
      _
    // Predicated region
    $region6: #{tpu_custom_call.1} parent=1 // pred_check
      _
    $region7: #{tpu_custom_call.1} parent=1 // pred_check_branch
      %19 = sbr.rel (0) target = $region9
    $region8: #{tpu_custom_call.1} parent=1 // pred_region
      %20 = dma.done [#allocation3], 128
    $region9: #{tpu_custom_call.1} parent=1 // pred_fallthru
      _
    %v21 = vld [vmem:[#allocation2] sm:$0xff]
    %22 = vst [vmem:[#allocation5] sm:$0xff] %v21
    // Predicated region
    $region10: #{tpu_custom_call.1} parent=1 // pred_check
      _
    $region11: #{tpu_custom_call.1} parent=1 // pred_check_branch
      %24 = sbr.rel (0) target = $region13
    $region12: #{tpu_custom_call.1} parent=1 // pred_region
      %s26 = ssub.s32 128, 128
      %27 = vsyncadd [#allocation4], %s26
      %s29 = sshll.u32 [#allocation5], 4
      %s30 = int_to_ptr.vmem [resolvable:$true] %s29
      %32 = dma.vmem_to_hbm [thread:$0]  %s30, 128, %s1, [#allocation4]
    $region13: #{tpu_custom_call.1} parent=1 // pred_fallthru
      _
    // Predicated region
    $region14: #{tpu_custom_call.1} parent=1 // pred_check
      _
    $region15: #{tpu_custom_call.1} parent=1 // pred_check_branch
      %34 = sbr.rel (0) target = $region17
    $region16: #{tpu_custom_call.1} parent=1 // pred_region
      %35 = dma.done [#allocation4], 128
    $region17: #{tpu_custom_call.1} parent=1 // pred_fallthru
      _
    %36 = vsyncpa [#allocation3], 1
    %37 = vsyncpa [#allocation4], 1

</llo_original>
